<compile_context>
chip_gen: v6e
topology: v6e:2x2x1
jax: 0.10.0
libtpu: 0.0.40
codegen_flags: <defaults>
</compile_context>

<pallas_src>
import functools

import jax
import jax.numpy as jnp
from jax.experimental import pallas as pl
from jax.experimental.pallas import tpu as pltpu

LANE = 128
SUBLANE = 8
NEG_INF = -1e9  # bias pad value -> padded action columns get exactly zero probability


def _round_up(x, m):
    return (x + m - 1) // m * m


def _anetwork_kernel(x_ref, w1_ref, b1_ref, w2_ref, b2_ref, w3_ref, b3_ref,
                     out_ref):
    """Fused MLP forward on one batch tile:
    relu(xW1+b1) -> relu(.W2+b2) -> softmax(.W3+b3, axis=1)."""
    x = x_ref[...]  # f32 batch tile

    # Weights are stored bf16 (halves HBM->VMEM DMA bytes). Elementwise math
    # (bias add / ReLU / softmax) stays in f32 (v5e-safe: no bf16 VPU there);
    # activations are cast to bf16 only at the MXU inputs, accumulating in f32.
    h1 = jnp.dot(x.astype(jnp.bfloat16), w1_ref[...],
                 preferred_element_type=jnp.float32) + b1_ref[...]
    h1 = jnp.maximum(h1, 0.0)

    h2 = jnp.dot(h1.astype(jnp.bfloat16), w2_ref[...],
                 preferred_element_type=jnp.float32) + b2_ref[...]
    h2 = jnp.maximum(h2, 0.0)

    logits = jnp.dot(h2.astype(jnp.bfloat16), w3_ref[...],
                     preferred_element_type=jnp.float32) + b3_ref[...]

    # Numerically stable softmax over the lane-padded action dim. Padded
    # columns carry logit == NEG_INF -> exp underflows to 0 -> no effect on
    # the sum (keep b3 in f32 and keep the max-subtraction).
    logits = logits - jnp.max(logits, axis=1, keepdims=True)
    e = jnp.exp(logits)
    # Exact normalization: kernel is HBM-bound, VPU/EUP have slack, so the
    # precise divide is free and avoids the ~1e-3 bias of approx reciprocal.
    probs = e * pl.reciprocal(jnp.sum(e, axis=1, keepdims=True), approx=False)
    # bf16 writeback halves the dominant (lane-padded) HBM byte stream.
    out_ref[...] = probs.astype(out_ref.dtype)
    # TODO(synk): if a trace still shows the output DMA on the critical path,
    # pack 128/action_size batch rows per 128-lane output row instead of
    # lane-padding (strided/roll packing in-kernel + reshape in the wrapper).


@functools.partial(jax.jit, static_argnums=(2, 3))
def anetwork_forward(state, params, action_size, tile_b=1024):
    """state: [B, state_size] f32 -> action probabilities [B, action_size] f32.

    NOTE: for minimal input DMA, keep the rollout buffer holding `state` in
    bf16 (or lane-packed) at the producer; do NOT cast here in the wrapper
    (a separate XLA pass nets ~zero). The kernel accepts either dtype.
    """
    w1, b1, w2, b2, w3, b3 = params
    B, S = state.shape
    h1_size = w1.shape[1]
    h2_size = w2.shape[1]
    a_pad = w3.shape[1]

    # Tile choice: big tiles amortize the ~0.35 us per-grid-step overhead and
    # give bandwidth-efficient DMA bursts; VMEM stays at a few MB even
    # double-buffered (far under v7x's 64 MiB / 32 MiB scoped default).  Cap
    # the tile so the grid has >=2 steps when B allows it, so the "parallel"
    # batch axis actually shards across both v7x TensorCores (no-op on
    # single-TC v5e/v6e).  No whole-array padding: Pallas handles the ragged
    # last block (out-of-bounds rows are garbage but row-independent and are
    # never part of the returned [B, action_size] result).
    tile_b = max(SUBLANE, min(tile_b, _round_up(pl.cdiv(B, 2), SUBLANE)))
    grid_b = pl.cdiv(B, tile_b)

    cost = pl.CostEstimate(
        flops=2 * B * (S * h1_size + h1_size * h2_size + h2_size * a_pad),
        transcendentals=B * a_pad,
        bytes_accessed=int(state.size) * state.dtype.itemsize
        + B * a_pad * 2  # bf16 output
        + sum(int(p.size) * p.dtype.itemsize for p in params),
    )

    out = pl.pallas_call(
        _anetwork_kernel,
        out_shape=jax.ShapeDtypeStruct((B, a_pad), jnp.bfloat16),
        grid_spec=pl.GridSpec(
            grid=(grid_b,),
            in_specs=[
                # batch-tiled activations: auto double-buffered DMA pipeline.
                # TODO(synk): on v5e, if a trace shows exposed input DMA, add
                # pipeline_mode=pl.Buffered(3) here.
                pl.BlockSpec((tile_b, S), lambda i: (i, 0)),
                # weights/biases: constant block index -> no re-DMA across steps
                pl.BlockSpec(w1.shape, lambda i: (0, 0)),
                pl.BlockSpec(b1.shape, lambda i: (0, 0)),
                pl.BlockSpec(w2.shape, lambda i: (0, 0)),
                pl.BlockSpec(b2.shape, lambda i: (0, 0)),
                pl.BlockSpec(w3.shape, lambda i: (0, 0)),
                pl.BlockSpec(b3.shape, lambda i: (0, 0)),
            ],
            out_specs=pl.BlockSpec((tile_b, a_pad), lambda i: (i, 0)),
        ),
        compiler_params=pltpu.CompilerParams(
            # batch axis is embarrassingly parallel -> sharded across both
            # TensorCores on v7x; harmless on single-TC v5e/v6e.
            dimension_semantics=("parallel",),
        ),
        cost_estimate=cost,
    )(state, w1, b1, w2, b2, w3, b3)

    # Tiny [B, action_size] slice + cast back to f32 for the caller; the big
    # lane-padded writeback stayed bf16 inside the kernel.
    return out[:, :action_size].astype(jnp.float32)


def init_params(key, state_size, action_size, h1_size=64, h2_size=64):
    """Deterministic init mirroring nn.Linear's U(-1/sqrt(fan_in), 1/sqrt(fan_in)).
    Weights stored as [in, out] bf16; layer-3 output dim padded to 128 lanes.
    Biases stay f32 (the -1e9 pad sentinel must survive exactly)."""
    ks = jax.random.split(key, 6)

    def linear_init(kw, kb, fan_in, fan_out):
        bound = 1.0 / jnp.sqrt(jnp.asarray(fan_in, jnp.float32))
        w = jax.random.uniform(kw, (fan_in, fan_out), jnp.float32, -bound, bound)
        b = jax.random.uniform(kb, (1, fan_out), jnp.float32, -bound, bound)
        return w, b

    w1, b1 = linear_init(ks[0], ks[1], state_size, h1_size)
    w2, b2 = linear_init(ks[2], ks[3], h1_size, h2_size)
    w3, b3 = linear_init(ks[4], ks[5], h2_size, action_size)

    # lane-dense layer-3 layout: zero weight columns + NEG_INF bias columns
    a_pad = _round_up(max(action_size, LANE), LANE)
    w3 = jnp.pad(w3, ((0, 0), (0, a_pad - action_size)))
    b3 = jnp.pad(b3, ((0, 0), (0, a_pad - action_size)), constant_values=NEG_INF)

    to_bf16 = lambda w: w.astype(jnp.bfloat16)
    return (to_bf16(w1), b1, to_bf16(w2), b2, to_bf16(w3), b3)


def ref_forward(state, params, action_size):
    """Plain-JAX reference with identical precision choices (bf16 matmul inputs,
    f32 accumulation) for a tight correctness comparison."""
    w1, b1, w2, b2, w3, b3 = params
    dot = functools.partial(jnp.dot, preferred_element_type=jnp.float32)
    h = jnp.maximum(dot(state.astype(jnp.bfloat16), w1) + b1, 0.0)
    h = jnp.maximum(dot(h.astype(jnp.bfloat16), w2) + b2, 0.0)
    logits = dot(h.astype(jnp.bfloat16), w3) + b3
    return jax.nn.softmax(logits, axis=1)[:, :action_size]


if __name__ == "__main__":
    key = jax.random.PRNGKey(0)
    k_param, k_state = jax.random.split(key)

    batch = 8
    state_size = 8
    action_size = 4

    params = init_params(k_param, state_size, action_size)
    state = jax.random.normal(k_state, (batch, state_size), jnp.float32)

    # NOTE: in an RL loop, batch many env steps into one call — at tiny B the
    # cost is pure launch/DMA overhead; the batch grid scales to large B.
    probs = anetwork_forward(state, params, action_size)
    probs = jax.block_until_ready(probs)

    ref = ref_forward(state, params, action_size)
    assert probs.shape == (batch, action_size)
    # bf16 output quantization (~2^-9 relative on probs in [0,1]) is the only
    # extra error vs the f32 reference; normalization is exact.
    assert jnp.allclose(probs, ref, atol=5e-3), "mismatch vs reference"
    assert jnp.allclose(jnp.sum(probs, axis=1), 1.0, atol=1e-2)

    # TODO(synk): get_action's Categorical sampling / log_prob and the Adam
    # optimizer are host/training-side and intentionally not part of the kernel.
    print("KERNEL_OK")
</pallas_src>

<mosaic_0001>
module attributes {stable_mosaic.version = 11 : i64} {
  func.func @_anetwork_kernel(%arg0: i32, %arg1: memref<8x8xf32, #tpu.memory_space<vmem>>, %arg2: memref<8x64xbf16, #tpu.memory_space<vmem>>, %arg3: memref<1x64xf32, #tpu.memory_space<vmem>>, %arg4: memref<64x64xbf16, #tpu.memory_space<vmem>>, %arg5: memref<1x64xf32, #tpu.memory_space<vmem>>, %arg6: memref<64x128xbf16, #tpu.memory_space<vmem>>, %arg7: memref<1x128xf32, #tpu.memory_space<vmem>>, %arg8: memref<8x128xbf16, #tpu.memory_space<vmem>>) attributes {dimension_semantics = [#tpu.dimension_semantics<parallel>], iteration_bounds = array<i64: 1>, scalar_prefetch = 0 : i64, scratch_operands = 0 : i64, tpu.core_type = #tpu.core_type<tc>, window_params = [{transform_indices = @transform_0, window_bounds = array<i64: 8, 8>}, {pipeline_mode = #tpu.pipeline_mode<synchronous>, transform_indices = @transform_1, window_bounds = array<i64: 8, 64>}, {pipeline_mode = #tpu.pipeline_mode<synchronous>, transform_indices = @transform_2, window_bounds = array<i64: 1, 64>}, {pipeline_mode = #tpu.pipeline_mode<synchronous>, transform_indices = @transform_3, window_bounds = array<i64: 64, 64>}, {pipeline_mode = #tpu.pipeline_mode<synchronous>, transform_indices = @transform_4, window_bounds = array<i64: 1, 64>}, {pipeline_mode = #tpu.pipeline_mode<synchronous>, transform_indices = @transform_5, window_bounds = array<i64: 64, 128>}, {pipeline_mode = #tpu.pipeline_mode<synchronous>, transform_indices = @transform_6, window_bounds = array<i64: 1, 128>}, {transform_indices = @transform_7, window_bounds = array<i64: 8, 128>}]} {
    %c0 = arith.constant 0 : index
    %c0_0 = arith.constant 0 : index
    %0 = vector.load %arg1[%c0, %c0_0] : memref<8x8xf32, #tpu.memory_space<vmem>>, vector<8x8xf32>
    %1 = arith.truncf %0 : vector<8x8xf32> to vector<8x8xbf16>
    %c0_1 = arith.constant 0 : index
    %c0_2 = arith.constant 0 : index
    %2 = vector.load %arg2[%c0_1, %c0_2] : memref<8x64xbf16, #tpu.memory_space<vmem>>, vector<8x64xbf16>
    %cst = arith.constant dense<0.000000e+00> : vector<8x64xf32>
    %3 = tpu.matmul %1, %2, %cst {dimension_numbers = #tpu.dot_dimension_numbers<[1], [0], [0], [1], [0, 0, 1, 1], [], []>} : vector<8x8xbf16>, vector<8x64xbf16>, vector<8x64xf32> -> vector<8x64xf32>
    %c0_3 = arith.constant 0 : index
    %c0_4 = arith.constant 0 : index
    %4 = vector.load %arg3[%c0_3, %c0_4] : memref<1x64xf32, #tpu.memory_space<vmem>>, vector<1x64xf32>
    %5 = vector.broadcast %4 : vector<1x64xf32> to vector<8x64xf32>
    %6 = arith.addf %3, %5 : vector<8x64xf32>
    %cst_5 = arith.constant 0.000000e+00 : f32
    %7 = vector.broadcast %cst_5 : f32 to vector<8x64xf32>
    %8 = arith.maximumf %6, %7 : vector<8x64xf32>
    %9 = arith.truncf %8 : vector<8x64xf32> to vector<8x64xbf16>
    %c0_6 = arith.constant 0 : index
    %c0_7 = arith.constant 0 : index
    %10 = vector.load %arg4[%c0_6, %c0_7] : memref<64x64xbf16, #tpu.memory_space<vmem>>, vector<64x64xbf16>
    %cst_8 = arith.constant dense<0.000000e+00> : vector<8x64xf32>
    %11 = tpu.matmul %9, %10, %cst_8 {dimension_numbers = #tpu.dot_dimension_numbers<[1], [0], [0], [1], [0, 0, 1, 1], [], []>} : vector<8x64xbf16>, vector<64x64xbf16>, vector<8x64xf32> -> vector<8x64xf32>
    %c0_9 = arith.constant 0 : index
    %c0_10 = arith.constant 0 : index
    %12 = vector.load %arg5[%c0_9, %c0_10] : memref<1x64xf32, #tpu.memory_space<vmem>>, vector<1x64xf32>
    %13 = vector.broadcast %12 : vector<1x64xf32> to vector<8x64xf32>
    %14 = arith.addf %11, %13 : vector<8x64xf32>
    %cst_11 = arith.constant 0.000000e+00 : f32
    %15 = vector.broadcast %cst_11 : f32 to vector<8x64xf32>
    %16 = arith.maximumf %14, %15 : vector<8x64xf32>
    %17 = arith.truncf %16 : vector<8x64xf32> to vector<8x64xbf16>
    %c0_12 = arith.constant 0 : index
    %c0_13 = arith.constant 0 : index
    %18 = vector.load %arg6[%c0_12, %c0_13] : memref<64x128xbf16, #tpu.memory_space<vmem>>, vector<64x128xbf16>
    %cst_14 = arith.constant dense<0.000000e+00> : vector<8x128xf32>
    %19 = tpu.matmul %17, %18, %cst_14 {dimension_numbers = #tpu.dot_dimension_numbers<[1], [0], [0], [1], [0, 0, 1, 1], [], []>} : vector<8x64xbf16>, vector<64x128xbf16>, vector<8x128xf32> -> vector<8x128xf32>
    %c0_15 = arith.constant 0 : index
    %c0_16 = arith.constant 0 : index
    %20 = vector.load %arg7[%c0_15, %c0_16] : memref<1x128xf32, #tpu.memory_space<vmem>>, vector<1x128xf32>
    %21 = vector.broadcast %20 : vector<1x128xf32> to vector<8x128xf32>
    %22 = arith.addf %19, %21 : vector<8x128xf32>
    %cst_17 = arith.constant dense<0xFF800000> : vector<8xf32>
    %23 = vector.multi_reduction <maximumf>, %22, %cst_17 [1] : vector<8x128xf32> to vector<8xf32>
    %24 = vector.shape_cast %23 : vector<8xf32> to vector<8x1xf32>
    %25 = vector.broadcast %24 : vector<8x1xf32> to vector<8x128xf32>
    %26 = arith.subf %22, %25 : vector<8x128xf32>
    %27 = math.exp %26 : vector<8x128xf32>
    %cst_18 = arith.constant dense<0.000000e+00> : vector<8xf32>
    %28 = vector.multi_reduction <add>, %27, %cst_18 [1] : vector<8x128xf32> to vector<8xf32>
    %29 = vector.shape_cast %28 : vector<8xf32> to vector<8x1xf32>
    %30 = tpu.reciprocal %29 : vector<8x1xf32> -> vector<8x1xf32>
    %31 = vector.broadcast %30 : vector<8x1xf32> to vector<8x128xf32>
    %32 = arith.mulf %27, %31 : vector<8x128xf32>
    %33 = arith.truncf %32 : vector<8x128xf32> to vector<8x128xbf16>
    %c0_19 = arith.constant 0 : index
    %c0_20 = arith.constant 0 : index
    %34 = vector.load %arg8[%c0_19, %c0_20] : memref<8x128xbf16, #tpu.memory_space<vmem>>, vector<8x128xbf16>
    tpu.vector_store %arg8[%c0_19, %c0_20], %33 {strides = array<i32>} : memref<8x128xbf16, #tpu.memory_space<vmem>>, vector<8x128xbf16>,
    return
  }
  func.func @transform_0(%arg0: i32) -> (i32, i32) {
    %c0_i32 = arith.constant 0 : i32
    %c0_i32_0 = arith.constant 0 : i32
    return %arg0, %c0_i32 : i32, i32
  }
  func.func @transform_1(%arg0: i32) -> (i32, i32) {
    %c0_i32 = arith.constant 0 : i32
    %c0_i32_0 = arith.constant 0 : i32
    %c0_i32_1 = arith.constant 0 : i32
    return %c0_i32, %c0_i32_0 : i32, i32
  }
  func.func @transform_2(%arg0: i32) -> (i32, i32) {
    %c0_i32 = arith.constant 0 : i32
    %c0_i32_0 = arith.constant 0 : i32
    %c0_i32_1 = arith.constant 0 : i32
    return %c0_i32, %c0_i32_0 : i32, i32
  }
  func.func @transform_3(%arg0: i32) -> (i32, i32) {
    %c0_i32 = arith.constant 0 : i32
    %c0_i32_0 = arith.constant 0 : i32
    %c0_i32_1 = arith.constant 0 : i32
    return %c0_i32, %c0_i32_0 : i32, i32
  }
  func.func @transform_4(%arg0: i32) -> (i32, i32) {
    %c0_i32 = arith.constant 0 : i32
    %c0_i32_0 = arith.constant 0 : i32
    %c0_i32_1 = arith.constant 0 : i32
    return %c0_i32, %c0_i32_0 : i32, i32
  }
  func.func @transform_5(%arg0: i32) -> (i32, i32) {
    %c0_i32 = arith.constant 0 : i32
    %c0_i32_0 = arith.constant 0 : i32
    %c0_i32_1 = arith.constant 0 : i32
    return %c0_i32, %c0_i32_0 : i32, i32
  }
  func.func @transform_6(%arg0: i32) -> (i32, i32) {
    %c0_i32 = arith.constant 0 : i32
    %c0_i32_0 = arith.constant 0 : i32
    %c0_i32_1 = arith.constant 0 : i32
    return %c0_i32, %c0_i32_0 : i32, i32
  }
  func.func @transform_7(%arg0: i32) -> (i32, i32) {
    %c0_i32 = arith.constant 0 : i32
    %c0_i32_0 = arith.constant 0 : i32
    return %arg0, %c0_i32 : i32, i32
  }
}

</mosaic_0001>

<llo_original>
// kernel: anetwork_forward.1
$region0: #{anetwork_forward.1}
  #allocation0 [shape = 'u32[]', space=smem, size = 0x4, offset = 0x4, fixed_abs, tag = 'smem constant byte address 0x4 - core index']
  #allocation1 [shape = 'u32[144,128]{1,0:T(1,128)}', space=vmem, size = 0x12000, scoped, tag = 'internal scratch']
  %s0 = inlined_call_operand.hbm [shape: f32[8,8], index: 0, kind: input, shape index: {}]
  %s1 = inlined_call_operand.hbm [shape: bf16[8,64], index: 1, kind: input, shape index: {}]
  %s2 = inlined_call_operand.vmem [shape: f32[1,64], index: 2, kind: input, shape index: {}]
  %s3 = inlined_call_operand.hbm [shape: bf16[64,64], index: 3, kind: input, shape index: {}]
  %s4 = inlined_call_operand.vmem [shape: f32[1,64], index: 4, kind: input, shape index: {}]
  %s5 = inlined_call_operand.hbm [shape: bf16[64,128], index: 5, kind: input, shape index: {}]
  %s6 = inlined_call_operand.vmem [shape: f32[1,128], index: 6, kind: input, shape index: {}]
  %s7 = inlined_call_operand.vmem [shape: bf16[8,128], index: 7, kind: output, shape index: {}]
  %s8 = sld [smem:[#allocation0]]
  $region54: #{anetwork_forward.1} parent=0
    _
  %s10 = ssub.s32 1, %s8
  %s11 = scalar_select 0, %s10, %s8
  $region1: #{anetwork_forward.1} parent=0
    #allocation2 [shape = 'u8[4096]{0}', space=vmem, size = 0x1000, scoped, tag = 'input window, operand 0, single buffered']
    #allocation3 [shape = 's32[1]{0}', space=sflag, size = 0x4, scoped, tag = 'scoped memory for anetwork_forward.1']
    #allocation4 [shape = 'u8[2048]{0}', space=vmem, size = 0x800, scoped, tag = 'input window, operand 1, single buffered']
    #allocation5 [shape = 's32[1]{0}', space=sflag, size = 0x4, scoped, tag = 'scoped memory for anetwork_forward.1']
    #allocation6 [shape = 'u8[16384]{0}', space=vmem, size = 0x4000, scoped, tag = 'input window, operand 3, single buffered']
    #allocation7 [shape = 'u8[16384]{0}', space=vmem, size = 0x4000, scoped, tag = 'input window, operand 5, single buffered']
    #allocation8 [shape = 's32[1]{0}', space=sflag, size = 0x4, scoped, tag = 'scoped memory for anetwork_forward.1']
    %12 = vsyncpa [#allocation3], 0
    %13 = vsyncpa [#allocation5], 0
    %14 = vsyncpa [#allocation8], 0
    // Predicated region
    $region2: #{anetwork_forward.1} parent=1 // pred_check
      _
    $region3: #{anetwork_forward.1} parent=1 // pred_check_branch
      %16 = sbr.rel (0) target = $region5
    $region4: #{anetwork_forward.1} parent=1 // pred_region
      %s18 = ssub.s32 128, 128
      %19 = vsyncadd [#allocation3], %s18
      %s21 = sshll.u32 [#allocation2], 4
      %s22 = int_to_ptr.vmem [resolvable:$true] %s21
      %24 = dma.hbm_to_vmem [thread:$0]  %s0, 128, %s22, [#allocation3]
    $region5: #{anetwork_forward.1} parent=1 // pred_fallthru
      _
    // Predicated region
    $region6: #{anetwork_forward.1} parent=1 // pred_check
      _
    $region7: #{anetwork_forward.1} parent=1 // pred_check_branch
      %26 = sbr.rel (0) target = $region9
    $region8: #{anetwork_forward.1} parent=1 // pred_region
      %s28 = ssub.s32 64, 64
      %29 = vsyncadd [#allocation5], %s28
      %s31 = sshll.u32 [#allocation4], 4
      %s32 = int_to_ptr.vmem [resolvable:$true] %s31
      %34 = dma.hbm_to_vmem [thread:$0]  %s1, 64, %s32, [#allocation5]
    $region9: #{anetwork_forward.1} parent=1 // pred_fallthru
      _
    // Predicated region
    $region10: #{anetwork_forward.1} parent=1 // pred_check
      _
    $region11: #{anetwork_forward.1} parent=1 // pred_check_branch
      %36 = sbr.rel (0) target = $region13
    $region12: #{anetwork_forward.1} parent=1 // pred_region
      _
    $region13: #{anetwork_forward.1} parent=1 // pred_fallthru
      _
    // Predicated region
    $region14: #{anetwork_forward.1} parent=1 // pred_check
      _
    $region15: #{anetwork_forward.1} parent=1 // pred_check_branch
      %38 = sbr.rel (0) target = $region17
    $region16: #{anetwork_forward.1} parent=1 // pred_region
      %s40 = ssub.s32 512, 512
      %41 = vsyncadd [#allocation5], %s40
      %s42 = sshll.u32 [#allocation6], 4
      %s43 = int_to_ptr.vmem [resolvable:$true] %s42
      %48 = dma.hbm_to_vmem [thread:$0]  %s3, 512, %s43, [#allocation5], 64, 64, 4
    $region17: #{anetwork_forward.1} parent=1 // pred_fallthru
      _
    // Predicated region
    $region18: #{anetwork_forward.1} parent=1 // pred_check
      _
    $region19: #{anetwork_forward.1} parent=1 // pred_check_branch
      %50 = sbr.rel (0) target = $region21
    $region20: #{anetwork_forward.1} parent=1 // pred_region
      _
    $region21: #{anetwork_forward.1} parent=1 // pred_fallthru
      _
    // Predicated region
    $region22: #{anetwork_forward.1} parent=1 // pred_check
      _
    $region23: #{anetwork_forward.1} parent=1 // pred_check_branch
      %52 = sbr.rel (0) target = $region25
    $region24: #{anetwork_forward.1} parent=1 // pred_region
      %s54 = ssub.s32 512, 512
      %55 = vsyncadd [#allocation8], %s54
      %s56 = sshll.u32 [#allocation7], 4
      %s57 = int_to_ptr.vmem [resolvable:$true] %s56
      %62 = dma.hbm_to_vmem [thread:$0]  %s5, 512, %s57, [#allocation8], 64, 64, 4
    $region25: #{anetwork_forward.1} parent=1 // pred_fallthru
      _
    // Predicated region
    $region26: #{anetwork_forward.1} parent=1 // pred_check
      _
    $region27: #{anetwork_forward.1} parent=1 // pred_check_branch
      %64 = sbr.rel (0) target = $region29
    $region28: #{anetwork_forward.1} parent=1 // pred_region
      _
    $region29: #{anetwork_forward.1} parent=1 // pred_fallthru
      _
    // Predicated region
    $region30: #{anetwork_forward.1} parent=1 // pred_check
      _
    $region31: #{anetwork_forward.1} parent=1 // pred_check_branch
      %66 = sbr.rel (0) target = $region33
    $region32: #{anetwork_forward.1} parent=1 // pred_region
      %67 = dma.done [#allocation3], 128
    $region33: #{anetwork_forward.1} parent=1 // pred_fallthru
      _
    // Predicated region
    $region34: #{anetwork_forward.1} parent=1 // pred_check
      _
    $region35: #{anetwork_forward.1} parent=1 // pred_check_branch
      %69 = sbr.rel (0) target = $region37
    $region36: #{anetwork_forward.1} parent=1 // pred_region
      %70 = dma.done [#allocation5], 64
    $region37: #{anetwork_forward.1} parent=1 // pred_fallthru
      _
    // Predicated region
    $region38: #{anetwork_forward.1} parent=1 // pred_check
      _
    $region39: #{anetwork_forward.1} parent=1 // pred_check_branch
      %72 = sbr.rel (0) target = $region41
    $region40: #{anetwork_forward.1} parent=1 // pred_region
      %73 = dma.done [#allocation5], 512
    $region41: #{anetwork_forward.1} parent=1 // pred_fallthru
      _
    // Predicated region
    $region42: #{anetwork_forward.1} parent=1 // pred_check
      _
    $region43: #{anetwork_forward.1} parent=1 // pred_check_branch
      %75 = sbr.rel (0) target = $region45
    $region44: #{anetwork_forward.1} parent=1 // pred_region
      %76 = dma.done [#allocation8], 512
    $region45: #{anetwork_forward.1} parent=1 // pred_fallthru
      _
    %v78 = vld [vmem:[#allocation2] sm:$0xff]
    %v79 = vpack.c.bf16 %v78, %v78
    %v80 = vld [vmem:[#allocation4] sm:$0xf]
    %v81 = vld [vmem:[%s2] sm:$0x1]
    %v83 = vlaneseq
    %v84 = vshrl.u32 %v83, 7
    %v85 = vsub.s32 0, %v84
    %v86 = vrot.slane %v81, %v85
    %vm88 = vcmask 64512
    %v90 = vsel %vm88, %v79, 0
    %vm92 = vcmask 1043456
    %v94 = vsel %vm92, %v80, 0
    %96 = vmatprep.subr.bf16.mxu0 0
    %97 = vmatpush1.bf16.msra.mxu0 0
    %98 = vmatprep.subr.bf16.mxu0 0
    %99 = vmatpush1.bf16.msra.mxu0 0
    %100 = vmatprep.subr.bf16.mxu0 0
    %101 = vmatpush1.bf16.msra.mxu0 0
    %102 = vmatprep.subr.bf16.mxu0 0
    %103 = vmatpush1.bf16.msra.mxu0 0
    %104 = vmatprep.subr.bf16.mxu0 0
    %105 = vmatpush1.bf16.msra.mxu0 0
    %106 = vmatprep.subr.bf16.mxu0 0
    %107 = vmatpush1.bf16.msra.mxu0 0
    %108 = vmatprep.subr.bf16.mxu0 0
    %109 = vmatpush1.bf16.msra.mxu0 0
    %110 = vmatprep.subr.bf16.mxu0 0
    %111 = vmatpush1.bf16.msra.mxu0 %v94
    %112 = vmatprep.subr.bf16.mxu0 0
    %113 = vmatpush2.bf16.msra.mxu0 0
    %114 = vmatprep.subr.bf16.mxu0 0
    %115 = vmatpush2.bf16.msra.mxu0 0
    %116 = vmatprep.subr.bf16.mxu0 0
    %117 = vmatpush2.bf16.msra.mxu0 0
    %118 = vmatprep.subr.bf16.mxu0 0
    %119 = vmatpush2.bf16.msra.mxu0 0
    %120 = vmatprep.subr.bf16.mxu0 0
    %121 = vmatpush2.bf16.msra.mxu0 0
    %122 = vmatprep.subr.bf16.mxu0 0
    %123 = vmatpush2.bf16.msra.mxu0 0
    %124 = vmatprep.subr.bf16.mxu0 0
    %125 = vmatpush2.bf16.msra.mxu0 0
    %126 = vmatprep.subr.bf16.mxu0 0
    %127 = vmatpush2.bf16.msra.mxu0 0
    %128 = vmatprep.mubr.bf16.mxu0 0
    %129 = vmatmul.mubr.bf16.gmra.mxu0 %v90
    %v130 = vpop.f32.mrf.mxu0
    %v131 = vadd.f32 %v86, %v130
    %v132 = vpop.f32.mrf.mxu0
    %v133 = vpop.f32.mrf.mxu0
    %v134 = vpop.f32.mrf.mxu0
    %135 = vdwg.mxu0
    %v136 = vmax.f32 %v131, 0.0
    %v137 = vpack.c.bf16 %v136, %v136
    %v138 = vld [vmem:[#allocation6] sm:$0xf]
    %v139 = vld [vmem:[#allocation6 + $0x4] sm:$0xf]
    %v140 = vld [vmem:[#allocation6 + $0x8] sm:$0xf]
    %v141 = vld [vmem:[#allocation6 + $0xc] sm:$0xf]
    %v142 = vld [vmem:[#allocation6 + $0x10] sm:$0xf]
    %v143 = vld [vmem:[#allocation6 + $0x14] sm:$0xf]
    %v144 = vld [vmem:[#allocation6 + $0x18] sm:$0xf]
    %v145 = vld [vmem:[#allocation6 + $0x1c] sm:$0xf]
    %v146 = vld [vmem:[%s4] sm:$0x1]
    %v148 = vlaneseq
    %v149 = vshrl.u32 %v148, 7
    %v150 = vsub.s32 0, %v149
    %v151 = vrot.slane %v146, %v150
    %v161 = vunpack.c.l.b16 %v138
    %v162 = vunpack.c.l.b16 %v139
    %v163 = vunpack.c.l.b16 %v140
    %v164 = vunpack.c.l.b16 %v141
    %v165 = vunpack.c.l.b16 %v142
    %v166 = vunpack.c.l.b16 %v143
    %v167 = vunpack.c.l.b16 %v144
    %v168 = vunpack.c.l.b16 %v145
    %v169 = vpack.c.b16 %v162, %v161
    %v170 = vpack.c.b16 %v164, %v163
    %v171 = vpack.c.b16 %v166, %v165
    %v172 = vpack.c.b16 %v168, %v167
    %vm177 = vcmask 523264
    %v179 = vsel %vm177, %v137, 0
    %181 = vmatprep.subr.bf16.mxu0 0
    %182 = vmatpush1.bf16.msra.mxu0 0
    %183 = vmatprep.subr.bf16.mxu0 0
    %184 = vmatpush1.bf16.msra.mxu0 0
    %185 = vmatprep.subr.bf16.mxu0 0
    %186 = vmatpush1.bf16.msra.mxu0 0
    %187 = vmatprep.subr.bf16.mxu0 0
    %188 = vmatpush1.bf16.msra.mxu0 0
    %189 = vmatprep.subr.bf16.mxu0 0
    %190 = vmatpush1.bf16.msra.mxu0 %v172
    %191 = vmatprep.subr.bf16.mxu0 0
    %192 = vmatpush1.bf16.msra.mxu0 %v171
    %193 = vmatprep.subr.bf16.mxu0 0
    %194 = vmatpush1.bf16.msra.mxu0 %v170
    %195 = vmatprep.subr.bf16.mxu0 0
    %196 = vmatpush1.bf16.msra.mxu0 %v169
    %197 = vmatprep.subr.bf16.mxu0 0
    %198 = vmatpush2.bf16.msra.mxu0 0
    %199 = vmatprep.subr.bf16.mxu0 0
    %200 = vmatpush2.bf16.msra.mxu0 0
    %201 = vmatprep.subr.bf16.mxu0 0
    %202 = vmatpush2.bf16.msra.mxu0 0
    %203 = vmatprep.subr.bf16.mxu0 0
    %204 = vmatpush2.bf16.msra.mxu0 0
    %205 = vmatprep.subr.bf16.mxu0 0
    %206 = vmatpush2.bf16.msra.mxu0 0
    %207 = vmatprep.subr.bf16.mxu0 0
    %208 = vmatpush2.bf16.msra.mxu0 0
    %209 = vmatprep.subr.bf16.mxu0 0
    %210 = vmatpush2.bf16.msra.mxu0 0
    %211 = vmatprep.subr.bf16.mxu0 0
    %212 = vmatpush2.bf16.msra.mxu0 0
    %213 = vmatprep.mubr.bf16.mxu0 0
    %214 = vmatmul.mubr.bf16.gmra.mxu0 %v179
    %v215 = vpop.f32.mrf.mxu0
    %v216 = vadd.f32 %v151, %v215
    %v217 = vpop.f32.mrf.mxu0
    %v218 = vpop.f32.mrf.mxu0
    %v219 = vpop.f32.mrf.mxu0
    %220 = vdwg.mxu0
    %v221 = vmax.f32 %v216, 0.0
    %v222 = vpack.c.bf16 %v221, %v221
    %v223 = vld [vmem:[#allocation7] sm:$0xf]
    %v224 = vld [vmem:[#allocation7 + $0x4] sm:$0xf]
    %v225 = vld [vmem:[#allocation7 + $0x8] sm:$0xf]
    %v226 = vld [vmem:[#allocation7 + $0xc] sm:$0xf]
    %v227 = vld [vmem:[#allocation7 + $0x10] sm:$0xf]
    %v228 = vld [vmem:[#allocation7 + $0x14] sm:$0xf]
    %v229 = vld [vmem:[#allocation7 + $0x18] sm:$0xf]
    %v230 = vld [vmem:[#allocation7 + $0x1c] sm:$0xf]
    %v231 = vld [vmem:[%s6] sm:$0x1]
    %v233 = vlaneseq
    %v234 = vshrl.u32 %v233, 7
    %v235 = vsub.s32 0, %v234
    %v236 = vrot.slane %v231, %v235
    %v246 = vunpack.c.l.b16 %v223
    %v247 = vunpack.c.l.b16 %v224
    %v248 = vunpack.c.l.b16 %v225
    %v249 = vunpack.c.l.b16 %v226
    %v250 = vunpack.c.l.b16 %v227
    %v251 = vunpack.c.l.b16 %v228
    %v252 = vunpack.c.l.b16 %v229
    %v253 = vunpack.c.l.b16 %v230
    %v254 = vpack.c.b16 %v247, %v246
    %v255 = vpack.c.b16 %v249, %v248
    %v256 = vpack.c.b16 %v251, %v250
    %v257 = vpack.c.b16 %v253, %v252
    %v263 = vsel %vm177, %v222, 0
    %265 = vmatprep.subr.bf16.mxu0 0
    %266 = vmatpush1.bf16.msra.mxu0 0
    %267 = vmatprep.subr.bf16.mxu0 0
    %268 = vmatpush1.bf16.msra.mxu0 0
    %269 = vmatprep.subr.bf16.mxu0 0
    %270 = vmatpush1.bf16.msra.mxu0 0
    %271 = vmatprep.subr.bf16.mxu0 0
    %272 = vmatpush1.bf16.msra.mxu0 0
    %273 = vmatprep.subr.bf16.mxu0 0
    %274 = vmatpush1.bf16.msra.mxu0 %v257
    %275 = vmatprep.subr.bf16.mxu0 0
    %276 = vmatpush1.bf16.msra.mxu0 %v256
    %277 = vmatprep.subr.bf16.mxu0 0
    %278 = vmatpush1.bf16.msra.mxu0 %v255
    %279 = vmatprep.subr.bf16.mxu0 0
    %280 = vmatpush1.bf16.msra.mxu0 %v254
    %281 = vmatprep.subr.bf16.mxu0 0
    %282 = vmatpush2.bf16.msra.mxu0 0
    %283 = vmatprep.subr.bf16.mxu0 0
    %284 = vmatpush2.bf16.msra.mxu0 0
    %285 = vmatprep.subr.bf16.mxu0 0
    %286 = vmatpush2.bf16.msra.mxu0 0
    %287 = vmatprep.subr.bf16.mxu0 0
    %288 = vmatpush2.bf16.msra.mxu0 0
    %289 = vmatprep.subr.bf16.mxu0 0
    %290 = vmatpush2.bf16.msra.mxu0 0
    %291 = vmatprep.subr.bf16.mxu0 0
    %292 = vmatpush2.bf16.msra.mxu0 0
    %293 = vmatprep.subr.bf16.mxu0 0
    %294 = vmatpush2.bf16.msra.mxu0 0
    %295 = vmatprep.subr.bf16.mxu0 0
    %296 = vmatpush2.bf16.msra.mxu0 0
    %297 = vmatprep.mubr.bf16.mxu0 0
    %298 = vmatmul.mubr.bf16.gmra.mxu0 %v263
    %v299 = vpop.f32.mrf.mxu0
    %v300 = vadd.f32 %v236, %v299
    %v301 = vpop.f32.mrf.mxu0
    %v302 = vpop.f32.mrf.mxu0
    %v303 = vpop.f32.mrf.mxu0
    %304 = vdwg.mxu0
    %305 = vmax.xlane.f32.xlu0 %v300
    %v306 = vpop.xlane.xlu0 %305
    %v307 = vsub.f32 %v300, %v306
    %v308 = vmul.f32 %v307, 1.442695
    %v309 = vpow.pop %v308
    %310 = vadd.xlane.f32.xlu0 %v309
    %v311 = vpop.xlane.xlu0 %310
    %v312 = vrcp.pop %v311
    %v313 = vmul.f32 %v309, %v312
    %v314 = vpack.c.bf16 %v313, %v313
    %315 = vst [vmem:[%s7] sm:$0xf] %v314
    // Predicated region
    $region46: #{anetwork_forward.1} parent=1 // pred_check
      _
    $region47: #{anetwork_forward.1} parent=1 // pred_check_branch
      %317 = sbr.rel (0) target = $region49
    $region48: #{anetwork_forward.1} parent=1 // pred_region
      _
    $region49: #{anetwork_forward.1} parent=1 // pred_fallthru
      _
    // Predicated region
    $region50: #{anetwork_forward.1} parent=1 // pred_check
      _
    $region51: #{anetwork_forward.1} parent=1 // pred_check_branch
      %319 = sbr.rel (0) target = $region53
    $region52: #{anetwork_forward.1} parent=1 // pred_region
      _
    $region53: #{anetwork_forward.1} parent=1 // pred_fallthru
      _
    %320 = vsyncpa [#allocation3], 1
    %321 = vsyncpa [#allocation5], 1
    %322 = vsyncpa [#allocation8], 1

</llo_original>
